<compile_context>
chip_gen: v5e
topology: v5e:2x2
jax: 0.10.0
libtpu: 0.0.40
codegen_flags: <defaults>
</compile_context>

<pallas_src>
import jax
import jax.numpy as jnp
from jax.experimental import pallas as pl
from jax.experimental.pallas import tpu as pltpu


def _cdiv(a, b):
    return -(-a // b)


def _round_up(x, m):
    return ((x + m - 1) // m) * m


def _d4_pool_kernel(x_ref, o_ref):
    # x_ref: (tg, 8, thw) tile, o_ref: (tg, thw) tile.
    # Unrolled elementwise maxes keep the 8-way reduce on the VPU (strided
    # sublane loads + vmax) rather than the XLU cross-sublane reduce path.
    acc = x_ref[:, 0, :]
    for k in range(1, 8):
        acc = jnp.maximum(acc, x_ref[:, k, :])
    o_ref[...] = acc


def _choose_tiles(g, hw, itemsize, sub_mult, target_block_bytes):
    """Pick (tg, thw) so the (tg, 8, thw) input block is ~target_block_bytes."""
    plane = max(1, target_block_bytes // (8 * itemsize))   # budget for tg*thw
    g_pad = _round_up(g, sub_mult)
    hw_pad = _round_up(hw, 128)

    if g_pad * hw_pad <= plane:
        # One block covers everything (megacore guard may split it later).
        return g, hw
    if hw_pad * sub_mult <= plane:
        # Full spatial per block; tile the group axis (sublane-aligned), and
        # let tg grow until the byte target is met (thw is not capped first).
        tg = (plane // hw_pad) // sub_mult * sub_mult
        return min(max(tg, sub_mult), g), hw
    # Spatial too large even for one sublane-tile of groups: tile spatial.
    tg = min(sub_mult, g)
    thw = (plane // max(tg, 1)) // 128 * 128
    return tg, max(128, min(thw, hw_pad))


def _ensure_two_steps(g, hw, tg, thw, sub_mult):
    """Split an axis if a single block would cover the whole problem, so both
    v7x TensorCores get work and the pipeline has something to overlap."""
    if _cdiv(g, tg) * _cdiv(hw, thw) >= 2:
        return tg, thw
    if g > sub_mult:
        cand = _round_up(_cdiv(g, 2), sub_mult)
        if cand < g:
            return cand, thw
    if hw > 128:
        cand = _round_up(_cdiv(hw, 2), 128)
        if cand < hw:
            return tg, cand
    return tg, thw


def d4_pool(x, *, block_groups=None, block_spatial=None,
            max_block_bytes=16 << 20, min_pallas_bytes=4 << 20,
            force_pallas=False):
    b, c, h, w = x.shape
    if c % 8 != 0:
        raise ValueError("channel dim must be divisible by 8 for D_4_Pool")
    g = b * (c // 8)
    hw = h * w
    itemsize = x.dtype.itemsize
    total_bytes = g * 8 * hw * itemsize

    # Tiny workloads: kernel launch + pipeline prologue dominate; let XLA fuse.
    if not force_pallas and total_bytes < min_pallas_bytes:
        return jnp.max(x.reshape(b, c // 8, 8, h, w), axis=2)

    # dtype-aware sublane multiple (f32: 8, bf16: 16, int8/fp8: 32).
    sub_mult = {4: 8, 2: 16, 1: 32}.get(itemsize, 8)

    # Big blocks amortize the ~0.35us/step pipeline overhead, but clamp to
    # total/4 so medium inputs keep >=4 grid steps (overlap + megacore).
    target = int(min(max_block_bytes, max(2 << 20, total_bytes // 4)))

    if block_groups is not None or block_spatial is not None:
        tg = block_groups if block_groups is not None else min(g, 64)
        thw = block_spatial if block_spatial is not None else _round_up(hw, 128)
    else:
        tg, thw = _choose_tiles(g, hw, itemsize, sub_mult, target)
        tg, thw = _ensure_two_steps(g, hw, tg, thw, sub_mult)

    xr = x.reshape(g, 8, hw)

    in_block_bytes = tg * 8 * thw * itemsize
    out_block_bytes = tg * thw * itemsize
    # 2x (double-buffered) input + output blocks plus slack for compiler
    # scratch; with the 16 MiB block cap this stays ~40 MiB, comfortably under
    # v7x's 64 MiB physical VMEM (and trivially under v5e/v6e's 128 MiB).
    vmem_limit = int(max(2 * (in_block_bytes + out_block_bytes) + (4 << 20),
                         32 << 20))

    grid = (_cdiv(g, tg), _cdiv(hw, thw))

    out = pl.pallas_call(
        _d4_pool_kernel,
        out_shape=jax.ShapeDtypeStruct((g, hw), x.dtype),
        grid_spec=pl.GridSpec(
            grid=grid,
            in_specs=[pl.BlockSpec((tg, 8, thw), lambda i, j: (i, 0, j))],
            out_specs=pl.BlockSpec((tg, thw), lambda i, j: (i, j)),
        ),
        compiler_params=pltpu.CompilerParams(
            dimension_semantics=("parallel", "parallel"),
            vmem_limit_bytes=vmem_limit,
        ),
        cost_estimate=pl.CostEstimate(
            flops=7 * g * hw,                       # advisory: 7 maxes / out elem
            transcendentals=0,
            bytes_accessed=9 * g * hw * itemsize,   # 8 in + 1 out per out elem
        ),
    )(xr)

    return out.reshape(b, c // 8, h, w)


if __name__ == "__main__":
    key = jax.random.PRNGKey(0)

    # Small shape consistent with the module: b=2, c=32 (c//8 = 4), h=w=16.
    x = jax.random.normal(key, (2, 32, 16, 16), dtype=jnp.float32)
    y = jax.block_until_ready(d4_pool(x, force_pallas=True))
    b, c, h, w = x.shape
    ref = jnp.max(x.reshape(b, c // 8, 8, h, w), axis=2)
    assert y.shape == (b, c // 8, h, w)
    assert jnp.allclose(y, ref), "mismatch vs reference"

    # Odd spatial size (14x14 = 196, not a multiple of 128) exercises the
    # cdiv grid + partial boundary-block path with a full-extent lane block.
    x2 = jax.random.normal(jax.random.PRNGKey(1), (2, 48, 14, 14),
                           dtype=jnp.float32)
    y2 = jax.block_until_ready(d4_pool(x2, force_pallas=True))
    ref2 = jnp.max(x2.reshape(2, 6, 8, 14, 14), axis=2)
    assert y2.shape == (2, 6, 14, 14)
    assert jnp.allclose(y2, ref2), "mismatch vs reference (odd spatial)"

    print("KERNEL_OK")
</pallas_src>

<mosaic_0001>
module attributes {stable_mosaic.version = 11 : i64} {
  func.func @_d4_pool_kernel(%arg0: i32, %arg1: i32, %arg2: memref<8x8x128xf32, #tpu.memory_space<vmem>>, %arg3: memref<8x128xf32, #tpu.memory_space<vmem>>) attributes {dimension_semantics = [#tpu.dimension_semantics<parallel>, #tpu.dimension_semantics<parallel>], iteration_bounds = array<i64: 1, 2>, scalar_prefetch = 0 : i64, scratch_operands = 0 : i64, tpu.core_type = #tpu.core_type<tc>, window_params = [{transform_indices = @transform_0, window_bounds = array<i64: 8, 8, 128>}, {transform_indices = @transform_1, window_bounds = array<i64: 8, 128>}]} {
    %c0 = arith.constant 0 : index
    %c0_0 = arith.constant 0 : index
    %c0_1 = arith.constant 0 : index
    %0 = vector.load %arg2[%c0, %c0_0, %c0_1] : memref<8x8x128xf32, #tpu.memory_space<vmem>>, vector<8x1x128xf32>
    %1 = vector.shape_cast %0 : vector<8x1x128xf32> to vector<8x128xf32>
    %c0_2 = arith.constant 0 : index
    %c1 = arith.constant 1 : index
    %c0_3 = arith.constant 0 : index
    %2 = vector.load %arg2[%c0_2, %c1, %c0_3] : memref<8x8x128xf32, #tpu.memory_space<vmem>>, vector<8x1x128xf32>
    %3 = vector.shape_cast %2 : vector<8x1x128xf32> to vector<8x128xf32>
    %4 = arith.maximumf %1, %3 : vector<8x128xf32>
    %c0_4 = arith.constant 0 : index
    %c2 = arith.constant 2 : index
    %c0_5 = arith.constant 0 : index
    %5 = vector.load %arg2[%c0_4, %c2, %c0_5] : memref<8x8x128xf32, #tpu.memory_space<vmem>>, vector<8x1x128xf32>
    %6 = vector.shape_cast %5 : vector<8x1x128xf32> to vector<8x128xf32>
    %7 = arith.maximumf %4, %6 : vector<8x128xf32>
    %c0_6 = arith.constant 0 : index
    %c3 = arith.constant 3 : index
    %c0_7 = arith.constant 0 : index
    %8 = vector.load %arg2[%c0_6, %c3, %c0_7] : memref<8x8x128xf32, #tpu.memory_space<vmem>>, vector<8x1x128xf32>
    %9 = vector.shape_cast %8 : vector<8x1x128xf32> to vector<8x128xf32>
    %10 = arith.maximumf %7, %9 : vector<8x128xf32>
    %c0_8 = arith.constant 0 : index
    %c4 = arith.constant 4 : index
    %c0_9 = arith.constant 0 : index
    %11 = vector.load %arg2[%c0_8, %c4, %c0_9] : memref<8x8x128xf32, #tpu.memory_space<vmem>>, vector<8x1x128xf32>
    %12 = vector.shape_cast %11 : vector<8x1x128xf32> to vector<8x128xf32>
    %13 = arith.maximumf %10, %12 : vector<8x128xf32>
    %c0_10 = arith.constant 0 : index
    %c5 = arith.constant 5 : index
    %c0_11 = arith.constant 0 : index
    %14 = vector.load %arg2[%c0_10, %c5, %c0_11] : memref<8x8x128xf32, #tpu.memory_space<vmem>>, vector<8x1x128xf32>
    %15 = vector.shape_cast %14 : vector<8x1x128xf32> to vector<8x128xf32>
    %16 = arith.maximumf %13, %15 : vector<8x128xf32>
    %c0_12 = arith.constant 0 : index
    %c6 = arith.constant 6 : index
    %c0_13 = arith.constant 0 : index
    %17 = vector.load %arg2[%c0_12, %c6, %c0_13] : memref<8x8x128xf32, #tpu.memory_space<vmem>>, vector<8x1x128xf32>
    %18 = vector.shape_cast %17 : vector<8x1x128xf32> to vector<8x128xf32>
    %19 = arith.maximumf %16, %18 : vector<8x128xf32>
    %c0_14 = arith.constant 0 : index
    %c7 = arith.constant 7 : index
    %c0_15 = arith.constant 0 : index
    %20 = vector.load %arg2[%c0_14, %c7, %c0_15] : memref<8x8x128xf32, #tpu.memory_space<vmem>>, vector<8x1x128xf32>
    %21 = vector.shape_cast %20 : vector<8x1x128xf32> to vector<8x128xf32>
    %22 = arith.maximumf %19, %21 : vector<8x128xf32>
    %c0_16 = arith.constant 0 : index
    %c0_17 = arith.constant 0 : index
    %23 = vector.load %arg3[%c0_16, %c0_17] : memref<8x128xf32, #tpu.memory_space<vmem>>, vector<8x128xf32>
    tpu.vector_store %arg3[%c0_16, %c0_17], %22 {strides = array<i32>} : memref<8x128xf32, #tpu.memory_space<vmem>>, vector<8x128xf32>,
    return
  }
  func.func @transform_0(%arg0: i32, %arg1: i32) -> (i32, i32, i32) {
    %c0_i32 = arith.constant 0 : i32
    %c0_i32_0 = arith.constant 0 : i32
    return %arg0, %c0_i32, %arg1 : i32, i32, i32
  }
  func.func @transform_1(%arg0: i32, %arg1: i32) -> (i32, i32) {
    %c0_i32 = arith.constant 0 : i32
    return %arg0, %arg1 : i32, i32
  }
}

</mosaic_0001>

<llo_original>
// kernel: tpu_custom_call.1
$region0: #{tpu_custom_call.1}
  #allocation0 [shape = 'u32[]', space=smem, size = 0x4, offset = 0x4, fixed_abs, tag = 'smem constant byte address 0x4 - core index']
  #allocation1 [shape = 'u32[72,128]{1,0:T(1,128)}', space=vmem, size = 0x9000, scoped, tag = 'internal scratch']
  %s0 = inlined_call_operand.hbm [shape: f32[8,8,256], index: 0, kind: input, shape index: {}]
  %s1 = inlined_call_operand.hbm [shape: f32[8,256], index: 1, kind: output, shape index: {}]
  %s2 = sld [smem:[#allocation0]]
  $region41: #{tpu_custom_call.1} parent=0
    _
  %s4 = ssub.s32 1, %s2
  %s5 = scalar_select 0, %s4, %s2
  $region1: #{tpu_custom_call.1} parent=0
    #allocation2 [shape = 'u8[65536]{0}', space=vmem, size = 0x10000, scoped, tag = 'input window, operand 0']
    #allocation3 [shape = 's32[2]{0}', space=sflag, size = 0x8, scoped, tag = 'scoped memory for tpu_custom_call.1']
    #allocation4 [shape = 's32[2]{0}', space=sflag, size = 0x8, scoped, tag = 'scoped memory for tpu_custom_call.1']
    #allocation5 [shape = 'u8[8192]{0}', space=vmem, size = 0x2000, scoped, tag = 'output window, operand 0']
    %6 = vsyncpa [#allocation3], 0
    %s7 = scalar_lea.sflag [#allocation3], 1
    %8 = vsyncpa %s7, 0
    %9 = vsyncpa [#allocation4], 0
    %s10 = scalar_lea.sflag [#allocation4], 1
    %11 = vsyncpa %s10, 0
    loop: start=0, step=1, limit=4
    $region2: #{tpu_custom_call.1} parent=1 // loop_pre_header
      _
    $region3: #{tpu_custom_call.1} parent=1 // loop_header
      %s13 = sphi 0, %s17
      %p14 = scmp.ge.s32.totalorder %s13, 4
      %s20 = sphi 0, %s32
      %s21 = sphi 0, %s28
      %s22 = sphi 0, %s20
      %s23 = sphi 0, %s21
      %s24 = sphi 0, %s22
      %s25 = sphi 0, %s23
      %s37 = sphi 0, %s39
      %s40 = sphi 0, %s37
      %s41 = sphi 0, %s40
      %s57 = sphi 0, %s41
      %s65 = sphi 0, %s67
      %s68 = sphi 0, %s65
      %s69 = sphi 0, %s68
      %s85 = sphi 0, %s69
    $region4: #{tpu_custom_call.1} parent=1 // loop_header_branch
      %16 = sbr.rel (%p14) target = $region8
    $region5: #{tpu_custom_call.1} parent=1 // loop_body
      %s18 = ssub.s32 %s13, 1
      %s19 = ssub.s32 %s13, 2
      %s26 = sadd.s32 1, %s21
      %p27 = scmp.ge.s32.totalorder %s26, 2
      %s28 = scalar_select %p27, 0, %s26
      %s29 = sadd.s32 1, %s20
      %s30 = scalar_select %p27, %s29, %s20
      %p31 = scmp.ge.s32.totalorder %s30, 1
      %s32 = scalar_select %p31, 0, %s30
      %s33 = ssub.s32 %s20, %s32
      %s34 = ssub.s32 %s21, %s28
      %s35 = sor.u32 %s33, %s34
      %p36 = scmp.eq.s32.totalorder %s35, 0
      %s38 = sadd.s32 %s37, 1
      %s39 = scalar_select %p36, %s37, %s38
      %p42 = pneg %p36
      %p43 = scmp.eq.s32.totalorder %s13, 1
      %p44 = por %p42, %p43
      %p45 = scmp.ne.s32.totalorder %s37, %s40
      %p46 = scmp.eq.s32.totalorder %s13, 0
      %p47 = por %p45, %p46
      %p48 = scmp.ne.s32.totalorder %s37, %s40
      %p49 = scmp.eq.s32.totalorder %s18, 1
      %p50 = por %p48, %p49
      %p51 = scmp.ne.s32.totalorder %s40, %s41
      %p52 = scmp.eq.s32.totalorder %s18, 0
      %p53 = por %p51, %p52
      %p54 = scmp.ne.s32.totalorder %s40, %s41
      %p55 = scmp.eq.s32.totalorder %s19, 1
      %p56 = por %p54, %p55
      %p58 = scmp.ne.s32.totalorder %s41, %s57
      %p59 = scmp.eq.s32.totalorder %s19, 0
      %p60 = por %p58, %p59
      %s61 = ssub.s32 %s20, %s32
      %s62 = ssub.s32 %s21, %s28
      %s63 = sor.u32 %s61, %s62
      %p64 = scmp.eq.s32.totalorder %s63, 0
      %s66 = sadd.s32 %s65, 1
      %s67 = scalar_select %p64, %s65, %s66
      %p70 = pneg %p64
      %p71 = scmp.eq.s32.totalorder %s13, 1
      %p72 = por %p70, %p71
      %p73 = scmp.ne.s32.totalorder %s65, %s68
      %p74 = scmp.eq.s32.totalorder %s13, 0
      %p75 = por %p73, %p74
      %p76 = scmp.ne.s32.totalorder %s65, %s68
      %p77 = scmp.eq.s32.totalorder %s18, 1
      %p78 = por %p76, %p77
      %p79 = scmp.ne.s32.totalorder %s68, %s69
      %p80 = scmp.eq.s32.totalorder %s18, 0
      %p81 = por %p79, %p80
      %p82 = scmp.ne.s32.totalorder %s68, %s69
      %p83 = scmp.eq.s32.totalorder %s19, 1
      %p84 = por %p82, %p83
      %p86 = scmp.ne.s32.totalorder %s69, %s85
      %p87 = scmp.eq.s32.totalorder %s19, 0
      %p88 = por %p86, %p87
      %p89 = scmp.le.s32.totalorder 1, %s13
      %p90 = scmp.lt.s32.totalorder %s13, 3
      %p91 = pnand %p89, %p90
      %p92 = pneg %p91
      // Predicated region
      $region9: #{tpu_custom_call.1} parent=5 // pred_check
        _
      $region10: #{tpu_custom_call.1} parent=5 // pred_check_branch
        %94 = sbr.rel (%p91) target = $region12
      $region11: #{tpu_custom_call.1} parent=5 // pred_region
        %s95 = ssub.s32 %s13, 1
      $region12: #{tpu_custom_call.1} parent=5 // pred_fallthru
        _
      %p96 = scmp.lt.s32.totalorder %s13, 2
      // Predicated region
      $region13: #{tpu_custom_call.1} parent=5 // pred_check
        %p97 = pneg %p96
      $region14: #{tpu_custom_call.1} parent=5 // pred_check_branch
        %99 = sbr.rel (%p97) target = $region16
      $region15: #{tpu_custom_call.1} parent=5 // pred_region
        // Predicated region
        $region17: #{tpu_custom_call.1} parent=15 // pred_check
          %p100 = pneg %p47
        $region18: #{tpu_custom_call.1} parent=15 // pred_check_branch
          %102 = sbr.rel (%p100) target = $region20
        $region19: #{tpu_custom_call.1} parent=15 // pred_region
          %s103 = sand.u32 %s37, 1
          %s104 = scalar_lea.sflag [#allocation3], %s103
          %s105 = sand.u32 %s37, 1
          %s106 = smul.addr %s105, 64
          %s107 = scalar_lea.vmem [#allocation2], %s106
          %s108 = smul.u32 8, %s20
          %110 = vsyncadd %s104, 0
          %s111 = smul.addr %s108, 2
          %s112 = sadd.s32 %s21, %s111
          %s113 = smul.addr %s112, 8
          %s114 = scalar_lea.hbm %s0, %s113
          %s115 = sshll.u32 %s114, 4
          %s116 = int_to_ptr.hbm [resolvable:$true] %s115
          %s117 = sshll.u32 %s107, 4
          %s118 = int_to_ptr.vmem [resolvable:$true] %s117
          %123 = dma.hbm_to_vmem [thread:$0]  %s116, 1024, %s118, %s104, 256, 128, 8
        $region20: #{tpu_custom_call.1} parent=15 // pred_fallthru
          _
      $region16: #{tpu_custom_call.1} parent=5 // pred_fallthru
        _
      %p124 = scmp.le.s32.totalorder 1, %s13
      %p125 = scmp.lt.s32.totalorder %s13, 3
      %p126 = pnand %p124, %p125
      %p127 = pneg %p126
      // Predicated region
      $region21: #{tpu_custom_call.1} parent=5 // pred_check
        _
      $region22: #{tpu_custom_call.1} parent=5 // pred_check_branch
        %129 = sbr.rel (%p126) target = $region24
      $region23: #{tpu_custom_call.1} parent=5 // pred_region
        %s130 = ssub.s32 %s13, 1
        %s131 = sand.u32 %s40, 1
        %s132 = scalar_lea.sflag [#allocation3], %s131
        %s133 = sand.u32 %s40, 1
        %s134 = smul.addr %s133, 64
        %s135 = scalar_lea.vmem [#allocation2], %s134
        // Predicated region
        $region25: #{tpu_custom_call.1} parent=23 // pred_check
          %p136 = pneg %p53
        $region26: #{tpu_custom_call.1} parent=23 // pred_check_branch
          %138 = sbr.rel (%p136) target = $region28
        $region27: #{tpu_custom_call.1} parent=23 // pred_region
          %140 = dma.done %s132, 1024
        $region28: #{tpu_custom_call.1} parent=23 // pred_fallthru
          _
        %s141 = sand.u32 %s40, 1
        %s142 = scalar_lea.sflag [#allocation3], %s141
        %s143 = sand.u32 %s40, 1
        %s144 = smul.addr %s143, 64
        %s145 = scalar_lea.vmem [#allocation2], %s144
        %p146 = pneg %p53
        %p147 = pneg %p50
        %p148 = pneg %p81
        %p149 = pneg %p78
        %s150 = sand.u32 %s68, 1
        %s151 = scalar_lea.sflag [#allocation4], %s150
        %s152 = sand.u32 %s68, 1
        %s153 = smul.addr %s152, 8
        %s154 = scalar_lea.vmem [#allocation5], %s153
        %s155 = smul.u32 8, %s22
        %v156 = vld [vmem:[%s135] sm:$0x1]
        %v157 = vld [vmem:[%s135 + $0x8] sm:$0x1]
        %v158 = vld [vmem:[%s135 + $0x10] sm:$0x1]
        %v159 = vld [vmem:[%s135 + $0x18] sm:$0x1]
        %v160 = vld [vmem:[%s135 + $0x20] sm:$0x1]
        %v161 = vld [vmem:[%s135 + $0x28] sm:$0x1]
        %v162 = vld [vmem:[%s135 + $0x30] sm:$0x1]
        %v163 = vld [vmem:[%s135 + $0x38] sm:$0x1]
        %v164 = vld [vmem:[%s135 + $0x1] sm:$0x1]
        %v165 = vld [vmem:[%s135 + $0x9] sm:$0x1]
        %v166 = vld [vmem:[%s135 + $0x11] sm:$0x1]
        %v167 = vld [vmem:[%s135 + $0x19] sm:$0x1]
        %v168 = vld [vmem:[%s135 + $0x21] sm:$0x1]
        %v169 = vld [vmem:[%s135 + $0x29] sm:$0x1]
        %v170 = vld [vmem:[%s135 + $0x31] sm:$0x1]
        %v171 = vld [vmem:[%s135 + $0x39] sm:$0x1]
        %v172 = vmax.f32 %v156, %v164
        %v173 = vmax.f32 %v157, %v165
        %v174 = vmax.f32 %v158, %v166
        %v175 = vmax.f32 %v159, %v167
        %v176 = vmax.f32 %v160, %v168
        %v177 = vmax.f32 %v161, %v169
        %v178 = vmax.f32 %v162, %v170
        %v179 = vmax.f32 %v163, %v171
        %v180 = vld [vmem:[%s135 + $0x2] sm:$0x1]
        %v181 = vld [vmem:[%s135 + $0xa] sm:$0x1]
        %v182 = vld [vmem:[%s135 + $0x12] sm:$0x1]
        %v183 = vld [vmem:[%s135 + $0x1a] sm:$0x1]
        %v184 = vld [vmem:[%s135 + $0x22] sm:$0x1]
        %v185 = vld [vmem:[%s135 + $0x2a] sm:$0x1]
        %v186 = vld [vmem:[%s135 + $0x32] sm:$0x1]
        %v187 = vld [vmem:[%s135 + $0x3a] sm:$0x1]
        %v188 = vmax.f32 %v172, %v180
        %v189 = vmax.f32 %v173, %v181
        %v190 = vmax.f32 %v174, %v182
        %v191 = vmax.f32 %v175, %v183
        %v192 = vmax.f32 %v176, %v184
        %v193 = vmax.f32 %v177, %v185
        %v194 = vmax.f32 %v178, %v186
        %v195 = vmax.f32 %v179, %v187
        %v196 = vld [vmem:[%s135 + $0x3] sm:$0x1]
        %v197 = vld [vmem:[%s135 + $0xb] sm:$0x1]
        %v198 = vld [vmem:[%s135 + $0x13] sm:$0x1]
        %v199 = vld [vmem:[%s135 + $0x1b] sm:$0x1]
        %v200 = vld [vmem:[%s135 + $0x23] sm:$0x1]
        %v201 = vld [vmem:[%s135 + $0x2b] sm:$0x1]
        %v202 = vld [vmem:[%s135 + $0x33] sm:$0x1]
        %v203 = vld [vmem:[%s135 + $0x3b] sm:$0x1]
        %v204 = vmax.f32 %v188, %v196
        %v205 = vmax.f32 %v189, %v197
        %v206 = vmax.f32 %v190, %v198
        %v207 = vmax.f32 %v191, %v199
        %v208 = vmax.f32 %v192, %v200
        %v209 = vmax.f32 %v193, %v201
        %v210 = vmax.f32 %v194, %v202
        %v211 = vmax.f32 %v195, %v203
        %v212 = vld [vmem:[%s135 + $0x4] sm:$0x1]
        %v213 = vld [vmem:[%s135 + $0xc] sm:$0x1]
        %v214 = vld [vmem:[%s135 + $0x14] sm:$0x1]
        %v215 = vld [vmem:[%s135 + $0x1c] sm:$0x1]
        %v216 = vld [vmem:[%s135 + $0x24] sm:$0x1]
        %v217 = vld [vmem:[%s135 + $0x2c] sm:$0x1]
        %v218 = vld [vmem:[%s135 + $0x34] sm:$0x1]
        %v219 = vld [vmem:[%s135 + $0x3c] sm:$0x1]
        %v220 = vmax.f32 %v204, %v212
        %v221 = vmax.f32 %v205, %v213
        %v222 = vmax.f32 %v206, %v214
        %v223 = vmax.f32 %v207, %v215
        %v224 = vmax.f32 %v208, %v216
        %v225 = vmax.f32 %v209, %v217
        %v226 = vmax.f32 %v210, %v218
        %v227 = vmax.f32 %v211, %v219
        %v228 = vld [vmem:[%s135 + $0x5] sm:$0x1]
        %v229 = vld [vmem:[%s135 + $0xd] sm:$0x1]
        %v230 = vld [vmem:[%s135 + $0x15] sm:$0x1]
        %v231 = vld [vmem:[%s135 + $0x1d] sm:$0x1]
        %v232 = vld [vmem:[%s135 + $0x25] sm:$0x1]
        %v233 = vld [vmem:[%s135 + $0x2d] sm:$0x1]
        %v234 = vld [vmem:[%s135 + $0x35] sm:$0x1]
        %v235 = vld [vmem:[%s135 + $0x3d] sm:$0x1]
        %v236 = vmax.f32 %v220, %v228
        %v237 = vmax.f32 %v221, %v229
        %v238 = vmax.f32 %v222, %v230
        %v239 = vmax.f32 %v223, %v231
        %v240 = vmax.f32 %v224, %v232
        %v241 = vmax.f32 %v225, %v233
        %v242 = vmax.f32 %v226, %v234
        %v243 = vmax.f32 %v227, %v235
        %v244 = vld [vmem:[%s135 + $0x6] sm:$0x1]
        %v245 = vld [vmem:[%s135 + $0xe] sm:$0x1]
        %v246 = vld [vmem:[%s135 + $0x16] sm:$0x1]
        %v247 = vld [vmem:[%s135 + $0x1e] sm:$0x1]
        %v248 = vld [vmem:[%s135 + $0x26] sm:$0x1]
        %v249 = vld [vmem:[%s135 + $0x2e] sm:$0x1]
        %v250 = vld [vmem:[%s135 + $0x36] sm:$0x1]
        %v251 = vld [vmem:[%s135 + $0x3e] sm:$0x1]
        %v252 = vmax.f32 %v236, %v244
        %v253 = vmax.f32 %v237, %v245
        %v254 = vmax.f32 %v238, %v246
        %v255 = vmax.f32 %v239, %v247
        %v256 = vmax.f32 %v240, %v248
        %v257 = vmax.f32 %v241, %v249
        %v258 = vmax.f32 %v242, %v250
        %v259 = vmax.f32 %v243, %v251
        %v260 = vld [vmem:[%s135 + $0x7] sm:$0x1]
        %v261 = vld [vmem:[%s135 + $0xf] sm:$0x1]
        %v262 = vld [vmem:[%s135 + $0x17] sm:$0x1]
        %v263 = vld [vmem:[%s135 + $0x1f] sm:$0x1]
        %v264 = vld [vmem:[%s135 + $0x27] sm:$0x1]
        %v265 = vld [vmem:[%s135 + $0x2f] sm:$0x1]
        %v266 = vld [vmem:[%s135 + $0x37] sm:$0x1]
        %v267 = vld [vmem:[%s135 + $0x3f] sm:$0x1]
        %v268 = vmax.f32 %v252, %v260
        %v269 = vmax.f32 %v253, %v261
        %v270 = vmax.f32 %v254, %v262
        %v271 = vmax.f32 %v255, %v263
        %v272 = vmax.f32 %v256, %v264
        %v273 = vmax.f32 %v257, %v265
        %v274 = vmax.f32 %v258, %v266
        %v275 = vmax.f32 %v259, %v267
        %v284 = vrot.slane %v269, 7
        %vm285 = vcmask 1041409
        %v286 = vsel %vm285, %v284, %v268
        %v287 = vrot.slane %v270, 6
        %vm288 = vcmask 1042434
        %v289 = vsel %vm288, %v287, %v286
        %v290 = vrot.slane %v271, 5
        %vm291 = vcmask 1043459
        %v292 = vsel %vm291, %v290, %v289
        %v293 = vrot.slane %v272, 4
        %vm294 = vcmask 1044484
        %v295 = vsel %vm294, %v293, %v292
        %v296 = vrot.slane %v273, 3
        %vm297 = vcmask 1045509
        %v298 = vsel %vm297, %v296, %v295
        %v299 = vrot.slane %v274, 2
        %vm300 = vcmask 1046534
        %v301 = vsel %vm300, %v299, %v298
        %v302 = vrot.slane %v275, 1
        %vm303 = vcmask 1047559
        %v304 = vsel %vm303, %v302, %v301
        %306 = vst [vmem:[%s154] sm:$0xff] %v304
        %s307 = sand.u32 %s68, 1
        %s308 = scalar_lea.sflag [#allocation4], %s307
        %s309 = sand.u32 %s68, 1
        %s310 = smul.addr %s309, 8
        %s311 = scalar_lea.vmem [#allocation5], %s310
        // Predicated region
        $region29: #{tpu_custom_call.1} parent=23 // pred_check
          %p312 = pneg %p78
        $region30: #{tpu_custom_call.1} parent=23 // pred_check_branch
          %314 = sbr.rel (%p312) target = $region32
        $region31: #{tpu_custom_call.1} parent=23 // pred_region
          %316 = vsyncadd %s308, 0
          %s317 = smul.addr %s22, 2
          %s318 = sadd.s32 %s23, %s317
          %s319 = smul.addr %s318, 8
          %s320 = scalar_lea.hbm %s1, %s319
          %s322 = sshll.u32 %s311, 4
          %s323 = int_to_ptr.vmem [resolvable:$true] %s322
          %s324 = sshll.u32 %s320, 4
          %s325 = int_to_ptr.hbm [resolvable:$true] %s324
          %327 = dma.vmem_to_hbm [thread:$0]  %s323, 128, %s325, %s308
        $region32: #{tpu_custom_call.1} parent=23 // pred_fallthru
          _
      $region24: #{tpu_custom_call.1} parent=5 // pred_fallthru
        _
      %p328 = scmp.le.s32.totalorder 2, %s13
      // Predicated region
      $region33: #{tpu_custom_call.1} parent=5 // pred_check
        %p329 = pneg %p328
      $region34: #{tpu_custom_call.1} parent=5 // pred_check_branch
        %331 = sbr.rel (%p329) target = $region36
      $region35: #{tpu_custom_call.1} parent=5 // pred_region
        %s332 = ssub.s32 %s13, 2
        // Predicated region
        $region37: #{tpu_custom_call.1} parent=35 // pred_check
          %p333 = pneg %p84
        $region38: #{tpu_custom_call.1} parent=35 // pred_check_branch
          %335 = sbr.rel (%p333) target = $region40
        $region39: #{tpu_custom_call.1} parent=35 // pred_region
          %s336 = sand.u32 %s69, 1
          %s337 = scalar_lea.sflag [#allocation4], %s336
          %s338 = sand.u32 %s69, 1
          %s339 = smul.addr %s338, 8
          %s340 = scalar_lea.vmem [#allocation5], %s339
          %342 = dma.done %s337, 128
        $region40: #{tpu_custom_call.1} parent=35 // pred_fallthru
          _
      $region36: #{tpu_custom_call.1} parent=5 // pred_fallthru
        _
    $region6: #{tpu_custom_call.1} parent=1 // loop_footer
      %s17 = sadd.s32 1, %s13
    $region7: #{tpu_custom_call.1} parent=1 // loop_footer_branch
      %12 = sbr.rel target = $region3
    $region8: #{tpu_custom_call.1} parent=1 // loop_exit
      _
    %343 = vsyncpa [#allocation3], 1
    %s344 = scalar_lea.sflag [#allocation3], 1
    %345 = vsyncpa %s344, 1
    %346 = vsyncpa [#allocation4], 1
    %s347 = scalar_lea.sflag [#allocation4], 1
    %348 = vsyncpa %s347, 1

</llo_original>
